<compile_context>
chip_gen: v7x
topology: tpu7x:2x2x1
jax: 0.10.0
libtpu: 0.0.40
codegen_flags: <defaults>
</compile_context>

<pallas_src>
import functools
import math

import jax
import jax.numpy as jnp
from jax import lax
from jax.experimental import pallas as pl
from jax.experimental.pallas import tpu as pltpu


def _round_up(a: int, b: int) -> int:
    return (a + b - 1) // b * b


def _choose_tiles(two_n: int) -> tuple[int, int]:
    """(row_tile, col_tile): lane/sublane aligned, MXU-friendly."""
    if two_n <= 128:
        return 128, 128
    if two_n <= 256:
        return 256, 256
    return 512, 256


def _vmem_limit_bytes() -> int:
    """Chip-derived scoped-VMEM budget (half of physical, >= 32 MiB)."""
    try:
        cap = int(pltpu.get_tpu_info().vmem_capacity_bytes)
    except Exception:
        cap = 64 * 1024 * 1024  # conservative (v7x physical size)
    return max(32 * 1024 * 1024, cap // 2)


def _simclr_kernel(x_row_ref, x_col_ref, loss_ref, denom_acc, pos_acc, *,
                   n_pairs: int, two_n: int, n_pad_cols: int,
                   row_tile: int, col_tile: int, col_resident: bool):
    r = pl.program_id(0)                    # row-tile index  ("parallel")
    c = pl.program_id(1)                    # col-tile index  ("arbitrary" reduction)

    @pl.when(c == 0)
    def _init():
        denom_acc[...] = jnp.zeros_like(denom_acc)
        pos_acc[...] = jnp.zeros_like(pos_acc)

    # Operands are already cosine-normalized, 1/T-scaled and cast in the wrapper.
    xr = x_row_ref[...]                                           # (TR, D)
    if col_resident:
        start = pl.multiple_of(c * col_tile, col_tile)
        xc = x_col_ref[pl.ds(start, col_tile), :]                 # (TC, D) slice of resident block
    else:
        xc = x_col_ref[...]                                       # (TC, D) streamed tile

    # (TR, TC) score tile: contract the feature dims (A . B^T), f32 accumulate.
    scores = lax.dot_general(
        xr, xc, dimension_numbers=(((1,), (1,)), ((), ())),
        preferred_element_type=jnp.float32)
    e = jnp.exp(scores)                                           # (TR, TC) f32

    # Lane-dense running sum: pure VPU adds; cross-lane reduce deferred to finalize.
    denom_acc[...] += e

    row_start = r * row_tile
    col_start = c * col_tile

    # ---- exact self-similarity removal: only on tiles intersecting the diagonal ----
    diag_hit = jnp.logical_and(row_start < col_start + col_tile,
                               col_start < row_start + row_tile)

    @pl.when(diag_hit)
    def _drop_diag():
        row_ids = row_start + lax.broadcasted_iota(jnp.int32, (row_tile, 1), 0)
        col_iota = lax.broadcasted_iota(jnp.int32, (row_tile, col_tile), 1)
        dmask = col_iota == (row_ids - col_start)
        denom_acc[...] -= jnp.where(dmask, e, 0.0)

    # ---- positive pairs: column == (row + N) mod 2N; guard so the mask only runs
    #      on the (at most 2) column tiles that can contain a positive ----
    ps = (row_start + n_pairs) % two_n
    pe = ps + row_tile
    seg_a_end = jnp.minimum(pe, two_n)
    hit_a = jnp.logical_and(ps < col_start + col_tile, col_start < seg_a_end)
    hit_b = jnp.logical_and(pe > two_n, col_start < pe - two_n)
    pos_hit = jnp.logical_or(hit_a, hit_b)

    @pl.when(pos_hit)
    def _gather_pos():
        row_ids = row_start + lax.broadcasted_iota(jnp.int32, (row_tile, 1), 0)
        tgt = jnp.remainder(row_ids + n_pairs, two_n) - col_start   # (TR, 1)
        col_iota = lax.broadcasted_iota(jnp.int32, (row_tile, col_tile), 1)
        pmask = col_iota == tgt
        pos_acc[...] += jnp.sum(jnp.where(pmask, e, 0.0), axis=1, keepdims=True)

    # ---- finalize this row tile ----
    @pl.when(c == pl.num_programs(1) - 1)
    def _finalize():
        # single cross-lane reduce per row tile; padded columns contribute exactly
        # exp(0) == 1 each (zero-vector operand rows) and are removed as a constant.
        denom = jnp.sum(denom_acc[...], axis=1, keepdims=True) - float(n_pad_cols)
        loss_ref[...] = jnp.log(denom) - jnp.log(pos_acc[...])


def simclr_loss_pallas(x: jax.Array, temperature: float, *,
                       mxu_dtype=jnp.bfloat16) -> jax.Array:
    """x: (2N, D) float array. Returns scalar NT-Xent loss (float32)."""
    assert x.ndim == 2, "only 2-D input supported"
    two_n, d = x.shape
    assert two_n % 2 == 0, "number of samples must be even"
    n_pairs = two_n // 2
    inv_temp = 1.0 / float(temperature)

    # --- hoisted prologue: cosine-normalize once, fold sqrt(1/T), cast for MXU ---
    xf = x.astype(jnp.float32)
    scale = lax.rsqrt(jnp.sum(xf * xf, axis=1, keepdims=True)) * math.sqrt(inv_temp)
    x_n = (xf * scale).astype(mxu_dtype)

    # --- tile sizes & padding (pad-and-mask; never a full-extent fallback) ---
    tr, tc = _choose_tiles(two_n)
    tile_lcm = max(tr, tc)                       # both 128 * 2^k -> max == lcm
    two_n_pad = _round_up(two_n, tile_lcm)
    n_pad = two_n_pad - two_n
    if n_pad:
        x_n = jnp.pad(x_n, ((0, n_pad), (0, 0)))  # exact zero rows

    grid = (two_n_pad // tr, two_n_pad // tc)

    # --- resident vs streamed column operand (chip-derived VMEM budget) ---
    vmem_limit = _vmem_limit_bytes()
    elt = jnp.dtype(mxu_dtype).itemsize
    col_bytes = two_n_pad * d * elt
    other_bytes = 2 * tr * d * elt + tr * tc * 4 + 4 * 1024 * 1024  # row bufs + scratch + slack
    col_resident = (2 * col_bytes + other_bytes) <= vmem_limit

    if col_resident:
        col_spec = pl.BlockSpec((two_n_pad, d), lambda r, c: (0, 0))   # single DMA
    else:
        col_spec = pl.BlockSpec((tc, d), lambda r, c: (c, 0))          # streamed

    kernel = functools.partial(
        _simclr_kernel, n_pairs=n_pairs, two_n=two_n, n_pad_cols=n_pad,
        row_tile=tr, col_tile=tc, col_resident=col_resident)

    per_row_loss = pl.pallas_call(
        kernel,
        out_shape=jax.ShapeDtypeStruct((two_n_pad, 1), jnp.float32),
        grid_spec=pltpu.PrefetchScalarGridSpec(
            num_scalar_prefetch=0,
            grid=grid,
            in_specs=[
                pl.BlockSpec((tr, d), lambda r, c: (r, 0)),   # row tile of x_n
                col_spec,                                     # column operand
            ],
            out_specs=pl.BlockSpec((tr, 1), lambda r, c: (r, 0)),
            scratch_shapes=[
                pltpu.VMEM((tr, tc), jnp.float32),   # lane-dense denominator accumulator
                pltpu.VMEM((tr, 1), jnp.float32),    # positive-pair accumulator
            ],
        ),
        compiler_params=pltpu.CompilerParams(
            dimension_semantics=("parallel", "arbitrary"),
            vmem_limit_bytes=vmem_limit,
        ),
    )(x_n, x_n)

    # tiny final reduction stays in plain JAX; padded rows are excluded.
    return jnp.mean(per_row_loss[:two_n, 0])


def simclr_loss_ref(x: jax.Array, temperature: float) -> jax.Array:
    """Plain-JAX reference for correctness check (matches the PyTorch module)."""
    x = x.astype(jnp.float32)
    two_n = x.shape[0]
    n = two_n // 2
    x_n = x / jnp.linalg.norm(x, axis=1, keepdims=True)
    sims = jnp.dot(x_n, x_n.T, precision=jax.lax.Precision.HIGHEST)
    exp_sims = jnp.exp(sims / temperature)
    idx = (jnp.arange(two_n) + n) % two_n
    pos = exp_sims[jnp.arange(two_n), idx][:, None]
    denom = jnp.sum(exp_sims, axis=1, keepdims=True) - jnp.exp(1.0 / temperature)
    return jnp.mean(-jnp.log(pos / denom))


if __name__ == "__main__":
    temperature = 0.5

    # small single-tile case (module expects a 2-D (2N, D) batch of projections)
    x1 = jax.random.normal(jax.random.PRNGKey(0), (8, 32), dtype=jnp.float32)
    got1 = jax.block_until_ready(simclr_loss_pallas(x1, temperature))
    ref1 = jax.block_until_ready(simclr_loss_ref(x1, temperature))
    assert jnp.allclose(got1, ref1, rtol=1e-2, atol=1e-2), (got1, ref1)

    # multi-row-tile / multi-col-tile case (guards + streamed reduction + megacore axis)
    x2 = jax.random.normal(jax.random.PRNGKey(1), (1024, 128), dtype=jnp.float32)
    got2 = jax.block_until_ready(simclr_loss_pallas(x2, temperature))
    ref2 = jax.block_until_ready(simclr_loss_ref(x2, temperature))
    assert jnp.allclose(got2, ref2, rtol=1e-2, atol=1e-2), (got2, ref2)

    # non-tile-multiple case (exercises pad-and-mask path)
    x3 = jax.random.normal(jax.random.PRNGKey(2), (300, 96), dtype=jnp.float32)
    got3 = jax.block_until_ready(simclr_loss_pallas(x3, temperature))
    ref3 = jax.block_until_ready(simclr_loss_ref(x3, temperature))
    assert jnp.allclose(got3, ref3, rtol=1e-2, atol=1e-2), (got3, ref3)

    print("KERNEL_OK")
</pallas_src>

<mosaic_0001>
module attributes {stable_mosaic.version = 11 : i64} {
  func.func @_simclr_kernel(%arg0: i32, %arg1: i32, %arg2: memref<128x32xbf16, #tpu.memory_space<vmem>>, %arg3: memref<128x32xbf16, #tpu.memory_space<vmem>>, %arg4: memref<128x1xf32, #tpu.memory_space<vmem>>, %arg5: memref<128x128xf32, #tpu.memory_space<vmem>>, %arg6: memref<128x1xf32, #tpu.memory_space<vmem>>) attributes {dimension_semantics = [#tpu.dimension_semantics<parallel>, #tpu.dimension_semantics<arbitrary>], iteration_bounds = array<i64: 1, 1>, scalar_prefetch = 0 : i64, scratch_operands = 2 : i64, tpu.core_type = #tpu.core_type<tc>, window_params = [{transform_indices = @transform_0, window_bounds = array<i64: 128, 32>}, {pipeline_mode = #tpu.pipeline_mode<synchronous>, transform_indices = @transform_1, window_bounds = array<i64: 128, 32>}, {transform_indices = @transform_2, window_bounds = array<i64: 128, 1>}]} {
    %c0_i32 = arith.constant 0 : i32
    %0 = arith.cmpi eq, %arg1, %c0_i32 : i32
    %1 = arith.extui %0 : i1 to i32
    %c0_i32_0 = arith.constant 0 : i32
    %2 = arith.cmpi ne, %1, %c0_i32_0 : i32
    scf.if %2 {
      %cst_24 = arith.constant 0.000000e+00 : f32
      %49 = vector.broadcast %cst_24 : f32 to vector<128x128xf32>
      %c0_25 = arith.constant 0 : index
      %c0_26 = arith.constant 0 : index
      %50 = vector.load %arg5[%c0_25, %c0_26] : memref<128x128xf32, #tpu.memory_space<vmem>>, vector<128x128xf32>
      tpu.vector_store %arg5[%c0_25, %c0_26], %49 {strides = array<i32>} : memref<128x128xf32, #tpu.memory_space<vmem>>, vector<128x128xf32>,
      %cst_27 = arith.constant 0.000000e+00 : f32
      %51 = vector.broadcast %cst_27 : f32 to vector<128x1xf32>
      %c0_28 = arith.constant 0 : index
      %c0_29 = arith.constant 0 : index
      %52 = vector.load %arg6[%c0_28, %c0_29] : memref<128x1xf32, #tpu.memory_space<vmem>>, vector<128x1xf32>
      tpu.vector_store %arg6[%c0_28, %c0_29], %51 {strides = array<i32>} : memref<128x1xf32, #tpu.memory_space<vmem>>, vector<128x1xf32>,
    } else {
    }
    %c0 = arith.constant 0 : index
    %c0_1 = arith.constant 0 : index
    %3 = vector.load %arg2[%c0, %c0_1] : memref<128x32xbf16, #tpu.memory_space<vmem>>, vector<128x32xbf16>
    %c128_i32 = arith.constant 128 : i32
    %4 = arith.muli %arg1, %c128_i32 : i32
    %5 = tpu.assume_multiple %4, 128 : i32
    %6 = arith.index_cast %5 : i32 to index
    %c0_2 = arith.constant 0 : index
    %7 = vector.load %arg3[%6, %c0_2] : memref<128x32xbf16, #tpu.memory_space<vmem>>, vector<128x32xbf16>
    %cst = arith.constant dense<0.000000e+00> : vector<128x128xf32>
    %8 = tpu.matmul %3, %7, %cst {dimension_numbers = #tpu.dot_dimension_numbers<[1], [1], [0], [0], [0, 0, 1, 0], [], []>} : vector<128x32xbf16>, vector<128x32xbf16>, vector<128x128xf32> -> vector<128x128xf32>
    %9 = math.exp %8 : vector<128x128xf32>
    %c0_3 = arith.constant 0 : index
    %c0_4 = arith.constant 0 : index
    %10 = vector.load %arg5[%c0_3, %c0_4] : memref<128x128xf32, #tpu.memory_space<vmem>>, vector<128x128xf32>
    %11 = arith.addf %10, %9 : vector<128x128xf32>
    %c0_5 = arith.constant 0 : index
    %c0_6 = arith.constant 0 : index
    %12 = vector.load %arg5[%c0_5, %c0_6] : memref<128x128xf32, #tpu.memory_space<vmem>>, vector<128x128xf32>
    tpu.vector_store %arg5[%c0_5, %c0_6], %11 {strides = array<i32>} : memref<128x128xf32, #tpu.memory_space<vmem>>, vector<128x128xf32>,
    %c128_i32_7 = arith.constant 128 : i32
    %13 = arith.muli %arg0, %c128_i32_7 : i32
    %c128_i32_8 = arith.constant 128 : i32
    %14 = arith.muli %arg1, %c128_i32_8 : i32
    %c128_i32_9 = arith.constant 128 : i32
    %15 = arith.addi %14, %c128_i32_9 : i32
    %16 = arith.cmpi slt, %13, %15 : i32
    %c128_i32_10 = arith.constant 128 : i32
    %17 = arith.addi %13, %c128_i32_10 : i32
    %18 = arith.cmpi slt, %14, %17 : i32
    %19 = arith.andi %16, %18 : i1
    %20 = arith.extui %19 : i1 to i32
    %c0_i32_11 = arith.constant 0 : i32
    %21 = arith.cmpi ne, %20, %c0_i32_11 : i32
    scf.if %21 {
      %49 = tpu.iota {dimensions = array<i32: 0>} : vector<128x1xi32>
      %50 = vector.broadcast %13 : i32 to vector<128x1xi32>
      %51 = arith.addi %50, %49 : vector<128x1xi32>
      %52 = tpu.iota {dimensions = array<i32: 1>} : vector<128x128xi32>
      %53 = vector.broadcast %14 : i32 to vector<128x1xi32>
      %54 = arith.subi %51, %53 : vector<128x1xi32>
      %55 = vector.broadcast %54 : vector<128x1xi32> to vector<128x128xi32>
      %56 = arith.cmpi eq, %52, %55 : vector<128x128xi32>
      %c0_24 = arith.constant 0 : index
      %c0_25 = arith.constant 0 : index
      %57 = vector.load %arg5[%c0_24, %c0_25] : memref<128x128xf32, #tpu.memory_space<vmem>>, vector<128x128xf32>
      %cst_26 = arith.constant 0.000000e+00 : f32
      %58 = vector.broadcast %cst_26 : f32 to vector<128x128xf32>
      %59 = arith.select %56, %9, %58 : vector<128x128xi1>, vector<128x128xf32>
      %60 = arith.subf %57, %59 : vector<128x128xf32>
      %c0_27 = arith.constant 0 : index
      %c0_28 = arith.constant 0 : index
      %61 = vector.load %arg5[%c0_27, %c0_28] : memref<128x128xf32, #tpu.memory_space<vmem>>, vector<128x128xf32>
      tpu.vector_store %arg5[%c0_27, %c0_28], %60 {strides = array<i32>} : memref<128x128xf32, #tpu.memory_space<vmem>>, vector<128x128xf32>,
    } else {
    }
    %c4_i32 = arith.constant 4 : i32
    %22 = arith.addi %13, %c4_i32 : i32
    %c8_i32 = arith.constant 8 : i32
    %c0_i32_12 = arith.constant 0 : i32
    %23 = arith.cmpi eq, %c8_i32, %c0_i32_12 : i32
    %c1_i32 = arith.constant 1 : i32
    %24 = arith.select %23, %c1_i32, %c8_i32 : i32
    %25 = arith.remsi %22, %24 : i32
    %c0_i32_13 = arith.constant 0 : i32
    %26 = arith.cmpi ne, %25, %c0_i32_13 : i32
    %c0_i32_14 = arith.constant 0 : i32
    %27 = arith.cmpi slt, %25, %c0_i32_14 : i32
    %c0_i32_15 = arith.constant 0 : i32
    %28 = arith.cmpi slt, %24, %c0_i32_15 : i32
    %29 = arith.xori %27, %28 : i1
    %30 = arith.andi %29, %26 : i1
    %31 = arith.addi %25, %24 : i32
    %32 = arith.select %30, %31, %25 : i32
    %c128_i32_16 = arith.constant 128 : i32
    %33 = arith.addi %32, %c128_i32_16 : i32
    %c8_i32_17 = arith.constant 8 : i32
    %34 = arith.minsi %33, %c8_i32_17 : i32
    %c128_i32_18 = arith.constant 128 : i32
    %35 = arith.addi %14, %c128_i32_18 : i32
    %36 = arith.cmpi slt, %32, %35 : i32
    %37 = arith.cmpi slt, %14, %34 : i32
    %38 = arith.andi %36, %37 : i1
    %c8_i32_19 = arith.constant 8 : i32
    %39 = arith.cmpi sgt, %33, %c8_i32_19 : i32
    %c8_i32_20 = arith.constant 8 : i32
    %40 = arith.subi %33, %c8_i32_20 : i32
    %41 = arith.cmpi slt, %14, %40 : i32
    %42 = arith.andi %39, %41 : i1
    %43 = arith.ori %38, %42 : i1
    %44 = arith.extui %43 : i1 to i32
    %c0_i32_21 = arith.constant 0 : i32
    %45 = arith.cmpi ne, %44, %c0_i32_21 : i32
    scf.if %45 {
      %49 = tpu.iota {dimensions = array<i32: 0>} : vector<128x1xi32>
      %50 = vector.broadcast %13 : i32 to vector<128x1xi32>
      %51 = arith.addi %50, %49 : vector<128x1xi32>
      %c4_i32_24 = arith.constant 4 : i32
      %52 = vector.broadcast %c4_i32_24 : i32 to vector<128x1xi32>
      %53 = arith.addi %51, %52 : vector<128x1xi32>
      %c8_i32_25 = arith.constant 8 : i32
      %c0_i32_26 = arith.constant 0 : i32
      %54 = arith.cmpi eq, %c8_i32_25, %c0_i32_26 : i32
      %c1_i32_27 = arith.constant 1 : i32
      %55 = arith.select %54, %c1_i32_27, %c8_i32_25 : i32
      %56 = vector.broadcast %55 : i32 to vector<128x1xi32>
      %57 = arith.remsi %53, %56 : vector<128x1xi32>
      %c0_i32_28 = arith.constant 0 : i32
      %58 = vector.broadcast %c0_i32_28 : i32 to vector<128x1xi32>
      %59 = arith.cmpi ne, %57, %58 : vector<128x1xi32>
      %c0_i32_29 = arith.constant 0 : i32
      %60 = vector.broadcast %c0_i32_29 : i32 to vector<128x1xi32>
      %61 = arith.cmpi slt, %57, %60 : vector<128x1xi32>
      %c0_i32_30 = arith.constant 0 : i32
      %62 = arith.cmpi slt, %55, %c0_i32_30 : i32
      %63 = vector.broadcast %62 : i1 to vector<128x1xi1>
      %64 = vector.broadcast %63 : vector<128x1xi1> to vector<128x1xi1>
      %65 = arith.xori %61, %64 : vector<128x1xi1>
      %66 = arith.andi %65, %59 : vector<128x1xi1>
      %67 = vector.broadcast %55 : i32 to vector<128x1xi32>
      %68 = arith.addi %57, %67 : vector<128x1xi32>
      %69 = arith.select %66, %68, %57 : vector<128x1xi1>, vector<128x1xi32>
      %70 = vector.broadcast %14 : i32 to vector<128x1xi32>
      %71 = arith.subi %69, %70 : vector<128x1xi32>
      %72 = tpu.iota {dimensions = array<i32: 1>} : vector<128x128xi32>
      %73 = vector.broadcast %71 : vector<128x1xi32> to vector<128x128xi32>
      %74 = arith.cmpi eq, %72, %73 : vector<128x128xi32>
      %c0_31 = arith.constant 0 : index
      %c0_32 = arith.constant 0 : index
      %75 = vector.load %arg6[%c0_31, %c0_32] : memref<128x1xf32, #tpu.memory_space<vmem>>, vector<128x1xf32>
      %cst_33 = arith.constant 0.000000e+00 : f32
      %76 = vector.broadcast %cst_33 : f32 to vector<128x128xf32>
      %77 = arith.select %74, %9, %76 : vector<128x128xi1>, vector<128x128xf32>
      %cst_34 = arith.constant dense<0.000000e+00> : vector<128xf32>
      %78 = vector.multi_reduction <add>, %77, %cst_34 [1] : vector<128x128xf32> to vector<128xf32>
      %79 = vector.shape_cast %78 : vector<128xf32> to vector<128x1xf32>
      %80 = arith.addf %75, %79 : vector<128x1xf32>
      %c0_35 = arith.constant 0 : index
      %c0_36 = arith.constant 0 : index
      %81 = vector.load %arg6[%c0_35, %c0_36] : memref<128x1xf32, #tpu.memory_space<vmem>>, vector<128x1xf32>
      tpu.vector_store %arg6[%c0_35, %c0_36], %80 {strides = array<i32>} : memref<128x1xf32, #tpu.memory_space<vmem>>, vector<128x1xf32>,
    } else {
    }
    %c0_i32_22 = arith.constant 0 : i32
    %46 = arith.cmpi eq, %arg1, %c0_i32_22 : i32
    %47 = arith.extui %46 : i1 to i32
    %c0_i32_23 = arith.constant 0 : i32
    %48 = arith.cmpi ne, %47, %c0_i32_23 : i32
    scf.if %48 {
      %c0_24 = arith.constant 0 : index
      %c0_25 = arith.constant 0 : index
      %49 = vector.load %arg5[%c0_24, %c0_25] : memref<128x128xf32, #tpu.memory_space<vmem>>, vector<128x128xf32>
      %cst_26 = arith.constant dense<0.000000e+00> : vector<128xf32>
      %50 = vector.multi_reduction <add>, %49, %cst_26 [1] : vector<128x128xf32> to vector<128xf32>
      %51 = vector.shape_cast %50 : vector<128xf32> to vector<128x1xf32>
      %cst_27 = arith.constant 1.200000e+02 : f32
      %52 = vector.broadcast %cst_27 : f32 to vector<128x1xf32>
      %53 = arith.subf %51, %52 : vector<128x1xf32>
      %54 = math.log %53 : vector<128x1xf32>
      %c0_28 = arith.constant 0 : index
      %c0_29 = arith.constant 0 : index
      %55 = vector.load %arg6[%c0_28, %c0_29] : memref<128x1xf32, #tpu.memory_space<vmem>>, vector<128x1xf32>
      %56 = math.log %55 : vector<128x1xf32>
      %57 = arith.subf %54, %56 : vector<128x1xf32>
      %c0_30 = arith.constant 0 : index
      %c0_31 = arith.constant 0 : index
      %58 = vector.load %arg4[%c0_30, %c0_31] : memref<128x1xf32, #tpu.memory_space<vmem>>, vector<128x1xf32>
      tpu.vector_store %arg4[%c0_30, %c0_31], %57 {strides = array<i32>} : memref<128x1xf32, #tpu.memory_space<vmem>>, vector<128x1xf32>,
    } else {
    }
    return
  }
  func.func @transform_0(%arg0: i32, %arg1: i32) -> (i32, i32) {
    %c0_i32 = arith.constant 0 : i32
    %c0_i32_0 = arith.constant 0 : i32
    return %arg0, %c0_i32 : i32, i32
  }
  func.func @transform_1(%arg0: i32, %arg1: i32) -> (i32, i32) {
    %c0_i32 = arith.constant 0 : i32
    %c0_i32_0 = arith.constant 0 : i32
    %c0_i32_1 = arith.constant 0 : i32
    return %c0_i32, %c0_i32_0 : i32, i32
  }
  func.func @transform_2(%arg0: i32, %arg1: i32) -> (i32, i32) {
    %c0_i32 = arith.constant 0 : i32
    %c0_i32_0 = arith.constant 0 : i32
    return %arg0, %c0_i32 : i32, i32
  }
}

</mosaic_0001>

<llo_original>
// kernel: tpu_custom_call.1
$region0: #{tpu_custom_call.1}
  #allocation0 [shape = 'u32[]', space=smem, size = 0x4, offset = 0x4, fixed_abs, tag = 'smem constant byte address 0x4 - core index']
  #allocation1 [shape = 'u32[144,128]{1,0:T(1,128)}', space=vmem, size = 0x12000, scoped, tag = 'internal scratch']
  #allocation2 [shape = 'f32[128,128]{1,0:T(8,128)}', space=vmem, size = 0x10000, scoped, tag = 'scratch operand']
  #allocation3 [shape = 'f32[128,1]{1,0:T(8,128)}', space=vmem, size = 0x10000, scoped, tag = 'scratch operand']
  %s0 = inlined_call_operand.vmem [shape: bf16[128,32], index: 0, kind: input, shape index: {}]
  %s1 = inlined_call_operand.vmem [shape: bf16[128,32], index: 1, kind: input, shape index: {}]
  %s2 = inlined_call_operand.vmem [shape: f32[128,1], index: 2, kind: output, shape index: {}]
  %s3 = sld [smem:[#allocation0]]
  $region34: #{tpu_custom_call.1} parent=0
    _
  %s5 = ssub.s32 1, %s3
  %s6 = scalar_select 0, %s5, %s3
  // Predicated region
  $region2: #{tpu_custom_call.1} parent=0 // pred_check
    _
  $region3: #{tpu_custom_call.1} parent=0 // pred_check_branch
    %8 = sbr.rel (0) target = $region5
  $region4: #{tpu_custom_call.1} parent=0 // pred_region
    _
  $region5: #{tpu_custom_call.1} parent=0 // pred_fallthru
    _
  // Predicated region
  $region6: #{tpu_custom_call.1} parent=0 // pred_check
    _
  $region7: #{tpu_custom_call.1} parent=0 // pred_check_branch
    %10 = sbr.rel (0) target = $region9
  $region8: #{tpu_custom_call.1} parent=0 // pred_region
    _
  $region9: #{tpu_custom_call.1} parent=0 // pred_fallthru
    _
  %p12 = scmp.eq.s32.totalorder 0, 0
  // Predicated region
  $region10: #{tpu_custom_call.1} parent=0 // pred_check
    %p13 = pneg %p12
  $region11: #{tpu_custom_call.1} parent=0 // pred_check_branch
    %15 = sbr.rel (%p13) target = $region13
  $region12: #{tpu_custom_call.1} parent=0 // pred_region
    %16 = vst [vmem:[#allocation2] sm:$0xff] 0.0
    %17 = vst [vmem:[#allocation2 + $0x8] sm:$0xff] 0.0
    %18 = vst [vmem:[#allocation2 + $0x10] sm:$0xff] 0.0
    %19 = vst [vmem:[#allocation2 + $0x18] sm:$0xff] 0.0
    %20 = vst [vmem:[#allocation2 + $0x20] sm:$0xff] 0.0
    %21 = vst [vmem:[#allocation2 + $0x28] sm:$0xff] 0.0
    %22 = vst [vmem:[#allocation2 + $0x30] sm:$0xff] 0.0
    %23 = vst [vmem:[#allocation2 + $0x38] sm:$0xff] 0.0
    %24 = vst [vmem:[#allocation2 + $0x40] sm:$0xff] 0.0
    %25 = vst [vmem:[#allocation2 + $0x48] sm:$0xff] 0.0
    %26 = vst [vmem:[#allocation2 + $0x50] sm:$0xff] 0.0
    %27 = vst [vmem:[#allocation2 + $0x58] sm:$0xff] 0.0
    %28 = vst [vmem:[#allocation2 + $0x60] sm:$0xff] 0.0
    %29 = vst [vmem:[#allocation2 + $0x68] sm:$0xff] 0.0
    %30 = vst [vmem:[#allocation2 + $0x70] sm:$0xff] 0.0
    %31 = vst [vmem:[#allocation2 + $0x78] sm:$0xff] 0.0
    %vm32 = vcmask 7168
    %33 = vst.msk [vmem:[#allocation3] sm:$0xff] %vm32, 0.0
    %34 = vst.msk [vmem:[#allocation3 + $0x8] sm:$0xff] %vm32, 0.0
    %35 = vst.msk [vmem:[#allocation3 + $0x10] sm:$0xff] %vm32, 0.0
    %36 = vst.msk [vmem:[#allocation3 + $0x18] sm:$0xff] %vm32, 0.0
    %37 = vst.msk [vmem:[#allocation3 + $0x20] sm:$0xff] %vm32, 0.0
    %38 = vst.msk [vmem:[#allocation3 + $0x28] sm:$0xff] %vm32, 0.0
    %39 = vst.msk [vmem:[#allocation3 + $0x30] sm:$0xff] %vm32, 0.0
    %40 = vst.msk [vmem:[#allocation3 + $0x38] sm:$0xff] %vm32, 0.0
    %41 = vst.msk [vmem:[#allocation3 + $0x40] sm:$0xff] %vm32, 0.0
    %42 = vst.msk [vmem:[#allocation3 + $0x48] sm:$0xff] %vm32, 0.0
    %43 = vst.msk [vmem:[#allocation3 + $0x50] sm:$0xff] %vm32, 0.0
    %44 = vst.msk [vmem:[#allocation3 + $0x58] sm:$0xff] %vm32, 0.0
    %45 = vst.msk [vmem:[#allocation3 + $0x60] sm:$0xff] %vm32, 0.0
    %46 = vst.msk [vmem:[#allocation3 + $0x68] sm:$0xff] %vm32, 0.0
    %47 = vst.msk [vmem:[#allocation3 + $0x70] sm:$0xff] %vm32, 0.0
    %48 = vst.msk [vmem:[#allocation3 + $0x78] sm:$0xff] %vm32, 0.0
  $region13: #{tpu_custom_call.1} parent=0 // pred_fallthru
    _
  %v49 = vld [vmem:[%s0] sm:$0xf]
  %v50 = vld [vmem:[%s0 + $0x4] sm:$0xf]
  %v51 = vld [vmem:[%s0 + $0x8] sm:$0xf]
  %v52 = vld [vmem:[%s0 + $0xc] sm:$0xf]
  %v53 = vld [vmem:[%s0 + $0x10] sm:$0xf]
  %v54 = vld [vmem:[%s0 + $0x14] sm:$0xf]
  %v55 = vld [vmem:[%s0 + $0x18] sm:$0xf]
  %v56 = vld [vmem:[%s0 + $0x1c] sm:$0xf]
  %v57 = vld [vmem:[%s0 + $0x20] sm:$0xf]
  %v58 = vld [vmem:[%s0 + $0x24] sm:$0xf]
  %v59 = vld [vmem:[%s0 + $0x28] sm:$0xf]
  %v60 = vld [vmem:[%s0 + $0x2c] sm:$0xf]
  %v61 = vld [vmem:[%s0 + $0x30] sm:$0xf]
  %v62 = vld [vmem:[%s0 + $0x34] sm:$0xf]
  %v63 = vld [vmem:[%s0 + $0x38] sm:$0xf]
  %v64 = vld [vmem:[%s0 + $0x3c] sm:$0xf]
  %s65 = smul.u32 0, 128
  %s66 = sshra.s32 %s65, 3
  %s67 = sand.u32 %s65, 7
  %s68 = smul.addr %s66, 4
  %s69 = scalar_lea.vmem %s1, %s68
  %v70 = vld [vmem:[%s69] sm:$0xf]
  %v71 = vld [vmem:[%s69 + $0x4] sm:$0xf]
  %v72 = vld [vmem:[%s69 + $0x8] sm:$0xf]
  %v73 = vld [vmem:[%s69 + $0xc] sm:$0xf]
  %v74 = vld [vmem:[%s69 + $0x10] sm:$0xf]
  %v75 = vld [vmem:[%s69 + $0x14] sm:$0xf]
  %v76 = vld [vmem:[%s69 + $0x18] sm:$0xf]
  %v77 = vld [vmem:[%s69 + $0x1c] sm:$0xf]
  %v78 = vld [vmem:[%s69 + $0x20] sm:$0xf]
  %v79 = vld [vmem:[%s69 + $0x24] sm:$0xf]
  %v80 = vld [vmem:[%s69 + $0x28] sm:$0xf]
  %v81 = vld [vmem:[%s69 + $0x2c] sm:$0xf]
  %v82 = vld [vmem:[%s69 + $0x30] sm:$0xf]
  %v83 = vld [vmem:[%s69 + $0x34] sm:$0xf]
  %v84 = vld [vmem:[%s69 + $0x38] sm:$0xf]
  %v85 = vld [vmem:[%s69 + $0x3c] sm:$0xf]
  %v102 = vunpack.c.l.b16 %v49
  %v103 = vunpack.c.l.b16 %v50
  %v104 = vunpack.c.l.b16 %v51
  %v105 = vunpack.c.l.b16 %v52
  %v106 = vunpack.c.l.b16 %v53
  %v107 = vunpack.c.l.b16 %v54
  %v108 = vunpack.c.l.b16 %v55
  %v109 = vunpack.c.l.b16 %v56
  %v110 = vunpack.c.l.b16 %v57
  %v111 = vunpack.c.l.b16 %v58
  %v112 = vunpack.c.l.b16 %v59
  %v113 = vunpack.c.l.b16 %v60
  %v114 = vunpack.c.l.b16 %v61
  %v115 = vunpack.c.l.b16 %v62
  %v116 = vunpack.c.l.b16 %v63
  %v117 = vunpack.c.l.b16 %v64
  %v118 = vpack.c.b16 %v103, %v102
  %v119 = vpack.c.b16 %v105, %v104
  %v120 = vpack.c.b16 %v107, %v106
  %v121 = vpack.c.b16 %v109, %v108
  %v122 = vpack.c.b16 %v111, %v110
  %v123 = vpack.c.b16 %v113, %v112
  %v124 = vpack.c.b16 %v115, %v114
  %v125 = vpack.c.b16 %v117, %v116
  %v142 = vunpack.c.l.b16 %v70
  %v143 = vunpack.c.l.b16 %v71
  %v144 = vunpack.c.l.b16 %v72
  %v145 = vunpack.c.l.b16 %v73
  %v146 = vunpack.c.l.b16 %v74
  %v147 = vunpack.c.l.b16 %v75
  %v148 = vunpack.c.l.b16 %v76
  %v149 = vunpack.c.l.b16 %v77
  %v150 = vunpack.c.l.b16 %v78
  %v151 = vunpack.c.l.b16 %v79
  %v152 = vunpack.c.l.b16 %v80
  %v153 = vunpack.c.l.b16 %v81
  %v154 = vunpack.c.l.b16 %v82
  %v155 = vunpack.c.l.b16 %v83
  %v156 = vunpack.c.l.b16 %v84
  %v157 = vunpack.c.l.b16 %v85
  %v158 = vpack.c.b16 %v143, %v142
  %v159 = vpack.c.b16 %v145, %v144
  %v160 = vpack.c.b16 %v147, %v146
  %v161 = vpack.c.b16 %v149, %v148
  %v162 = vpack.c.b16 %v151, %v150
  %v163 = vpack.c.b16 %v153, %v152
  %v164 = vpack.c.b16 %v155, %v154
  %v165 = vpack.c.b16 %v157, %v156
  %vm166 = vcmask 261120
  %v168 = vsel %vm166, %v118, 0
  %v171 = vsel %vm166, %v119, 0
  %v174 = vsel %vm166, %v120, 0
  %v177 = vsel %vm166, %v121, 0
  %v180 = vsel %vm166, %v122, 0
  %v183 = vsel %vm166, %v123, 0
  %v186 = vsel %vm166, %v124, 0
  %v189 = vsel %vm166, %v125, 0
  %v192 = vsel %vm166, %v158, 0
  %v195 = vsel %vm166, %v159, 0
  %v198 = vsel %vm166, %v160, 0
  %v201 = vsel %vm166, %v161, 0
  %v204 = vsel %vm166, %v162, 0
  %v207 = vsel %vm166, %v163, 0
  %v210 = vsel %vm166, %v164, 0
  %v213 = vsel %vm166, %v165, 0
  %215 = vmatprep.subr.bf16.mxu0 0
  %216 = vmatpush1.bf16.xpose.msra.mxu0 %v192
  %217 = vmatprep.subr.bf16.mxu0 0
  %218 = vmatpush1.bf16.xpose.msra.mxu0 %v195
  %219 = vmatprep.subr.bf16.mxu0 0
  %220 = vmatpush1.bf16.xpose.msra.mxu0 %v198
  %221 = vmatprep.subr.bf16.mxu0 0
  %222 = vmatpush1.bf16.xpose.msra.mxu0 %v201
  %223 = vmatprep.subr.bf16.mxu0 0
  %224 = vmatpush1.bf16.xpose.msra.mxu0 %v204
  %225 = vmatprep.subr.bf16.mxu0 0
  %226 = vmatpush1.bf16.xpose.msra.mxu0 %v207
  %227 = vmatprep.subr.bf16.mxu0 0
  %228 = vmatpush1.bf16.xpose.msra.mxu0 %v210
  %229 = vmatprep.subr.bf16.mxu0 0
  %230 = vmatpush1.bf16.xpose.msra.mxu0 %v213
  %231 = vmatprep.subr.bf16.mxu0 0
  %232 = vmatpush1.bf16.xpose.msra.mxu0 0
  %233 = vmatprep.subr.bf16.mxu0 0
  %234 = vmatpush1.bf16.xpose.msra.mxu0 0
  %235 = vmatprep.subr.bf16.mxu0 0
  %236 = vmatpush1.bf16.xpose.msra.mxu0 0
  %237 = vmatprep.subr.bf16.mxu0 0
  %238 = vmatpush1.bf16.xpose.msra.mxu0 0
  %239 = vmatprep.subr.bf16.mxu0 0
  %240 = vmatpush1.bf16.xpose.msra.mxu0 0
  %241 = vmatprep.subr.bf16.mxu0 0
  %242 = vmatpush1.bf16.xpose.msra.mxu0 0
  %243 = vmatprep.subr.bf16.mxu0 0
  %244 = vmatpush1.bf16.xpose.msra.mxu0 0
  %245 = vmatprep.subr.bf16.mxu0 0
  %246 = vmatpush1.bf16.xpose.msra.mxu0 0
  %247 = vmatprep.mubr.bf16.mxu0 0
  %248 = vmatmul.mubr.bf16.gmra.mrb[0].mxu0 %v168
  %v249 = vpop.f32.mrb[0].mxu0
  %v250 = vadd.f32 0.0, %v249
  %v251 = vpop.f32.mrb[0].mxu0
  %v252 = vpop.f32.mrb[0].mxu0
  %v253 = vadd.f32 0.0, %v252
  %v254 = vpop.f32.mrb[0].mxu0
  %255 = vmatprep.mubr.bf16.mxu0 0
  %256 = vmatmul.mubr.bf16.gmra.mrb[0].mxu0 %v171
  %v257 = vpop.f32.mrb[0].mxu0
  %v258 = vadd.f32 0.0, %v257
  %v259 = vpop.f32.mrb[0].mxu0
  %v260 = vpop.f32.mrb[0].mxu0
  %v261 = vadd.f32 0.0, %v260
  %v262 = vpop.f32.mrb[0].mxu0
  %263 = vmatprep.mubr.bf16.mxu0 0
  %264 = vmatmul.mubr.bf16.gmra.mrb[0].mxu0 %v174
  %v265 = vpop.f32.mrb[0].mxu0
  %v266 = vadd.f32 0.0, %v265
  %v267 = vpop.f32.mrb[0].mxu0
  %v268 = vpop.f32.mrb[0].mxu0
  %v269 = vadd.f32 0.0, %v268
  %v270 = vpop.f32.mrb[0].mxu0
  %271 = vmatprep.mubr.bf16.mxu0 0
  %272 = vmatmul.mubr.bf16.gmra.mrb[0].mxu0 %v177
  %v273 = vpop.f32.mrb[0].mxu0
  %v274 = vadd.f32 0.0, %v273
  %v275 = vpop.f32.mrb[0].mxu0
  %v276 = vpop.f32.mrb[0].mxu0
  %v277 = vadd.f32 0.0, %v276
  %v278 = vpop.f32.mrb[0].mxu0
  %279 = vmatprep.mubr.bf16.mxu0 0
  %280 = vmatmul.mubr.bf16.gmra.mrb[0].mxu0 %v180
  %v281 = vpop.f32.mrb[0].mxu0
  %v282 = vadd.f32 0.0, %v281
  %v283 = vpop.f32.mrb[0].mxu0
  %v284 = vpop.f32.mrb[0].mxu0
  %v285 = vadd.f32 0.0, %v284
  %v286 = vpop.f32.mrb[0].mxu0
  %287 = vmatprep.mubr.bf16.mxu0 0
  %288 = vmatmul.mubr.bf16.gmra.mrb[0].mxu0 %v183
  %v289 = vpop.f32.mrb[0].mxu0
  %v290 = vadd.f32 0.0, %v289
  %v291 = vpop.f32.mrb[0].mxu0
  %v292 = vpop.f32.mrb[0].mxu0
  %v293 = vadd.f32 0.0, %v292
  %v294 = vpop.f32.mrb[0].mxu0
  %295 = vmatprep.mubr.bf16.mxu0 0
  %296 = vmatmul.mubr.bf16.gmra.mrb[0].mxu0 %v186
  %v297 = vpop.f32.mrb[0].mxu0
  %v298 = vadd.f32 0.0, %v297
  %v299 = vpop.f32.mrb[0].mxu0
  %v300 = vpop.f32.mrb[0].mxu0
  %v301 = vadd.f32 0.0, %v300
  %v302 = vpop.f32.mrb[0].mxu0
  %303 = vmatprep.mubr.bf16.mxu0 0
  %304 = vmatmul.mubr.bf16.gmra.mrb[0].mxu0 %v189
  %v305 = vpop.f32.mrb[0].mxu0
  %v306 = vadd.f32 0.0, %v305
  %v307 = vpop.f32.mrb[0].mxu0
  %v308 = vpop.f32.mrb[0].mxu0
  %v309 = vadd.f32 0.0, %v308
  %v310 = vpop.f32.mrb[0].mxu0
  %311 = vdwg.mxu0
  %v312 = vmul.f32 %v250, 1.442695
  %v313 = vpow.pop %v312
  %v314 = vmul.f32 %v253, 1.442695
  %v315 = vpow.pop %v314
  %v316 = vmul.f32 %v258, 1.442695
  %v317 = vpow.pop %v316
  %v318 = vmul.f32 %v261, 1.442695
  %v319 = vpow.pop %v318
  %v320 = vmul.f32 %v266, 1.442695
  %v321 = vpow.pop %v320
  %v322 = vmul.f32 %v269, 1.442695
  %v323 = vpow.pop %v322
  %v324 = vmul.f32 %v274, 1.442695
  %v325 = vpow.pop %v324
  %v326 = vmul.f32 %v277, 1.442695
  %v327 = vpow.pop %v326
  %v328 = vmul.f32 %v282, 1.442695
  %v329 = vpow.pop %v328
  %v330 = vmul.f32 %v285, 1.442695
  %v331 = vpow.pop %v330
  %v332 = vmul.f32 %v290, 1.442695
  %v333 = vpow.pop %v332
  %v334 = vmul.f32 %v293, 1.442695
  %v335 = vpow.pop %v334
  %v336 = vmul.f32 %v298, 1.442695
  %v337 = vpow.pop %v336
  %v338 = vmul.f32 %v301, 1.442695
  %v339 = vpow.pop %v338
  %v340 = vmul.f32 %v306, 1.442695
  %v341 = vpow.pop %v340
  %v342 = vmul.f32 %v309, 1.442695
  %v343 = vpow.pop %v342
  %v344 = vld [vmem:[#allocation2] sm:$0xff]
  %v345 = vld [vmem:[#allocation2 + $0x8] sm:$0xff]
  %v346 = vld [vmem:[#allocation2 + $0x10] sm:$0xff]
  %v347 = vld [vmem:[#allocation2 + $0x18] sm:$0xff]
  %v348 = vld [vmem:[#allocation2 + $0x20] sm:$0xff]
  %v349 = vld [vmem:[#allocation2 + $0x28] sm:$0xff]
  %v350 = vld [vmem:[#allocation2 + $0x30] sm:$0xff]
  %v351 = vld [vmem:[#allocation2 + $0x38] sm:$0xff]
  %v352 = vld [vmem:[#allocation2 + $0x40] sm:$0xff]
  %v353 = vld [vmem:[#allocation2 + $0x48] sm:$0xff]
  %v354 = vld [vmem:[#allocation2 + $0x50] sm:$0xff]
  %v355 = vld [vmem:[#allocation2 + $0x58] sm:$0xff]
  %v356 = vld [vmem:[#allocation2 + $0x60] sm:$0xff]
  %v357 = vld [vmem:[#allocation2 + $0x68] sm:$0xff]
  %v358 = vld [vmem:[#allocation2 + $0x70] sm:$0xff]
  %v359 = vld [vmem:[#allocation2 + $0x78] sm:$0xff]
  %v360 = vadd.f32 %v344, %v313
  %v361 = vadd.f32 %v345, %v315
  %v362 = vadd.f32 %v346, %v317
  %v363 = vadd.f32 %v347, %v319
  %v364 = vadd.f32 %v348, %v321
  %v365 = vadd.f32 %v349, %v323
  %v366 = vadd.f32 %v350, %v325
  %v367 = vadd.f32 %v351, %v327
  %v368 = vadd.f32 %v352, %v329
  %v369 = vadd.f32 %v353, %v331
  %v370 = vadd.f32 %v354, %v333
  %v371 = vadd.f32 %v355, %v335
  %v372 = vadd.f32 %v356, %v337
  %v373 = vadd.f32 %v357, %v339
  %v374 = vadd.f32 %v358, %v341
  %v375 = vadd.f32 %v359, %v343
  %376 = vst [vmem:[#allocation2] sm:$0xff] %v360
  %377 = vst [vmem:[#allocation2 + $0x8] sm:$0xff] %v361
  %378 = vst [vmem:[#allocation2 + $0x10] sm:$0xff] %v362
  %379 = vst [vmem:[#allocation2 + $0x18] sm:$0xff] %v363
  %380 = vst [vmem:[#allocation2 + $0x20] sm:$0xff] %v364
  %381 = vst [vmem:[#allocation2 + $0x28] sm:$0xff] %v365
  %382 = vst [vmem:[#allocation2 + $0x30] sm:$0xff] %v366
  %383 = vst [vmem:[#allocation2 + $0x38] sm:$0xff] %v367
  %384 = vst [vmem:[#allocation2 + $0x40] sm:$0xff] %v368
  %385 = vst [vmem:[#allocation2 + $0x48] sm:$0xff] %v369
  %386 = vst [vmem:[#allocation2 + $0x50] sm:$0xff] %v370
  %387 = vst [vmem:[#allocation2 + $0x58] sm:$0xff] %v371
  %388 = vst [vmem:[#allocation2 + $0x60] sm:$0xff] %v372
  %389 = vst [vmem:[#allocation2 + $0x68] sm:$0xff] %v373
  %390 = vst [vmem:[#allocation2 + $0x70] sm:$0xff] %v374
  %391 = vst [vmem:[#allocation2 + $0x78] sm:$0xff] %v375
  %s392 = smul.u32 0, 128
  %s393 = sadd.s32 %s65, 128
  %p394 = scmp.lt.s32.totalorder %s392, %s393
  %s395 = sadd.s32 %s392, 128
  %p396 = scmp.lt.s32.totalorder %s65, %s395
  %p397 = pnand %p394, %p396
  %p398 = pneg %p397
  // Predicated region
  $region14: #{tpu_custom_call.1} parent=0 // pred_check
    _
  $region15: #{tpu_custom_call.1} parent=0 // pred_check_branch
    %400 = sbr.rel (%p397) target = $region17
  $region16: #{tpu_custom_call.1} parent=0 // pred_region
    %v401 = vlaneseq
    %v402 = vshrl.u32 %v401, 7
    %v403 = vadd.s32 %v402, 8
    %v404 = vadd.s32 %v402, 16
    %v405 = vadd.s32 %v402, 24
    %v406 = vadd.s32 %v402, 32
    %v407 = vadd.s32 %v402, 40
    %v408 = vadd.s32 %v402, 48
    %v409 = vadd.s32 %v402, 56
    %v410 = vadd.s32 %v402, 64
    %v411 = vadd.s32 %v402, 72
    %v412 = vadd.s32 %v402, 80
    %v413 = vadd.s32 %v402, 88
    %v414 = vadd.s32 %v402, 96
    %v415 = vadd.s32 %v402, 104
    %v416 = vadd.s32 %v402, 112
    %v417 = vadd.s32 %v402, 120
    %v418 = vstv %s392
    %v419 = vadd.s32 %v418, %v402
    %v420 = vadd.s32 %v418, %v403
    %v421 = vadd.s32 %v418, %v404
    %v422 = vadd.s32 %v418, %v405
    %v423 = vadd.s32 %v418, %v406
    %v424 = vadd.s32 %v418, %v407
    %v425 = vadd.s32 %v418, %v408
    %v426 = vadd.s32 %v418, %v409
    %v427 = vadd.s32 %v418, %v410
    %v428 = vadd.s32 %v418, %v411
    %v429 = vadd.s32 %v418, %v412
    %v430 = vadd.s32 %v418, %v413
    %v431 = vadd.s32 %v418, %v414
    %v432 = vadd.s32 %v418, %v415
    %v433 = vadd.s32 %v418, %v416
    %v434 = vadd.s32 %v418, %v417
    %v435 = vlaneseq
    %v436 = vand.u32 %v435, 127
    %v437 = vstv %s65
    %v438 = vsub.s32 %v419, %v437
    %v439 = vsub.s32 %v420, %v437
    %v440 = vsub.s32 %v421, %v437
    %v441 = vsub.s32 %v422, %v437
    %v442 = vsub.s32 %v423, %v437
    %v443 = vsub.s32 %v424, %v437
    %v444 = vsub.s32 %v425, %v437
    %v445 = vsub.s32 %v426, %v437
    %v446 = vsub.s32 %v427, %v437
    %v447 = vsub.s32 %v428, %v437
    %v448 = vsub.s32 %v429, %v437
    %v449 = vsub.s32 %v430, %v437
    %v450 = vsub.s32 %v431, %v437
    %v451 = vsub.s32 %v432, %v437
    %v452 = vsub.s32 %v433, %v437
    %v453 = vsub.s32 %v434, %v437
    %vm454 = vcmp.eq.s32.totalorder %v436, %v438
    %vm455 = vcmp.eq.s32.totalorder %v436, %v439
    %vm456 = vcmp.eq.s32.totalorder %v436, %v440
    %vm457 = vcmp.eq.s32.totalorder %v436, %v441
    %vm458 = vcmp.eq.s32.totalorder %v436, %v442
    %vm459 = vcmp.eq.s32.totalorder %v436, %v443
    %vm460 = vcmp.eq.s32.totalorder %v436, %v444
    %vm461 = vcmp.eq.s32.totalorder %v436, %v445
    %vm462 = vcmp.eq.s32.totalorder %v436, %v446
    %vm463 = vcmp.eq.s32.totalorder %v436, %v447
    %vm464 = vcmp.eq.s32.totalorder %v436, %v448
    %vm465 = vcmp.eq.s32.totalorder %v436, %v449
    %vm466 = vcmp.eq.s32.totalorder %v436, %v450
    %vm467 = vcmp.eq.s32.totalorder %v436, %v451
    %vm468 = vcmp.eq.s32.totalorder %v436, %v452
    %vm469 = vcmp.eq.s32.totalorder %v436, %v453
    %v470 = vld [vmem:[#allocation2] sm:$0xff]
    %v471 = vld [vmem:[#allocation2 + $0x8] sm:$0xff]
    %v472 = vld [vmem:[#allocation2 + $0x10] sm:$0xff]
    %v473 = vld [vmem:[#allocation2 + $0x18] sm:$0xff]
    %v474 = vld [vmem:[#allocation2 + $0x20] sm:$0xff]
    %v475 = vld [vmem:[#allocation2 + $0x28] sm:$0xff]
    %v476 = vld [vmem:[#allocation2 + $0x30] sm:$0xff]
    %v477 = vld [vmem:[#allocation2 + $0x38] sm:$0xff]
    %v478 = vld [vmem:[#allocation2 + $0x40] sm:$0xff]
    %v479 = vld [vmem:[#allocation2 + $0x48] sm:$0xff]
    %v480 = vld [vmem:[#allocation2 + $0x50] sm:$0xff]
    %v481 = vld [vmem:[#allocation2 + $0x58] sm:$0xff]
    %v482 = vld [vmem:[#allocation2 + $0x60] sm:$0xff]
    %v483 = vld [vmem:[#allocation2 + $0x68] sm:$0xff]
    %v484 = vld [vmem:[#allocation2 + $0x70] sm:$0xff]
    %v485 = vld [vmem:[#allocation2 + $0x78] sm:$0xff]
    %v486 = vsel %vm454, %v313, 0.0
    %v487 = vsel %vm455, %v315, 0.0
    %v488 = vsel %vm456, %v317, 0.0
    %v489 = vsel %vm457, %v319, 0.0
    %v490 = vsel %vm458, %v321, 0.0
    %v491 = vsel %vm459, %v323, 0.0
    %v492 = vsel %vm460, %v325, 0.0
    %v493 = vsel %vm461, %v327, 0.0
    %v494 = vsel %vm462, %v329, 0.0
    %v495 = vsel %vm463, %v331, 0.0
    %v496 = vsel %vm464, %v333, 0.0
    %v497 = vsel %vm465, %v335, 0.0
    %v498 = vsel %vm466, %v337, 0.0
    %v499 = vsel %vm467, %v339, 0.0
    %v500 = vsel %vm468, %v341, 0.0
    %v501 = vsel %vm469, %v343, 0.0
    %v502 = vsub.f32 %v470, %v486
    %v503 = vsub.f32 %v471, %v487
    %v504 = vsub.f32 %v472, %v488
    %v505 = vsub.f32 %v473, %v489
    %v506 = vsub.f32 %v474, %v490
    %v507 = vsub.f32 %v475, %v491
    %v508 = vsub.f32 %v476, %v492
    %v509 = vsub.f32 %v477, %v493
    %v510 = vsub.f32 %v478, %v494
    %v511 = vsub.f32 %v479, %v495
    %v512 = vsub.f32 %v480, %v496
    %v513 = vsub.f32 %v481, %v497
    %v514 = vsub.f32 %v482, %v498
    %v515 = vsub.f32 %v483, %v499
    %v516 = vsub.f32 %v484, %v500
    %v517 = vsub.f32 %v485, %v501
    %518 = vst [vmem:[#allocation2] sm:$0xff] %v502
    %519 = vst [vmem:[#allocation2 + $0x8] sm:$0xff] %v503
    %520 = vst [vmem:[#allocation2 + $0x10] sm:$0xff] %v504
    %521 = vst [vmem:[#allocation2 + $0x18] sm:$0xff] %v505
    %522 = vst [vmem:[#allocation2 + $0x20] sm:$0xff] %v506
    %523 = vst [vmem:[#allocation2 + $0x28] sm:$0xff] %v507
    %524 = vst [vmem:[#allocation2 + $0x30] sm:$0xff] %v508
    %525 = vst [vmem:[#allocation2 + $0x38] sm:$0xff] %v509
    %526 = vst [vmem:[#allocation2 + $0x40] sm:$0xff] %v510
    %527 = vst [vmem:[#allocation2 + $0x48] sm:$0xff] %v511
    %528 = vst [vmem:[#allocation2 + $0x50] sm:$0xff] %v512
    %529 = vst [vmem:[#allocation2 + $0x58] sm:$0xff] %v513
    %530 = vst [vmem:[#allocation2 + $0x60] sm:$0xff] %v514
    %531 = vst [vmem:[#allocation2 + $0x68] sm:$0xff] %v515
    %532 = vst [vmem:[#allocation2 + $0x70] sm:$0xff] %v516
    %533 = vst [vmem:[#allocation2 + $0x78] sm:$0xff] %v517
  $region17: #{tpu_custom_call.1} parent=0 // pred_fallthru
    _
  %s534 = sadd.s32 %s392, 4
  %p535 = scmp.lt.s32.totalorder %s534, 0
  %s536 = ssub.s32 0, %s534
  %s537 = scalar_select %p535, %s536, %s534
  %s538 = sand.u32 %s537, 7
  %s539 = ssub.s32 0, %s538
  %s540 = scalar_select %p535, %s539, %s538
  %p541 = scmp.ne.s32.totalorder %s540, 0
  %p542 = scmp.lt.s32.totalorder %s540, 0
  %p543 = pnand %p542, %p541
  %p544 = pneg %p543
  %s545 = sadd.s32 %s540, 8
  %s546 = scalar_select %p544, %s545, %s540
  %s547 = sadd.s32 %s546, 128
  %p548 = scmp.lt.s32.totalorder %s547, 8
  %s549 = scalar_select %p548, %s547, 8
  %p550 = scmp.lt.s32.totalorder %s546, %s393
  %p551 = scmp.lt.s32.totalorder %s65, %s549
  %p552 = pnand %p550, %p551
  %p553 = pneg %p552
  %p554 = scmp.gt.s32.totalorder %s547, 8
  %s555 = sadd.s32 %s546, 120
  %p556 = scmp.lt.s32.totalorder %s65, %s555
  %p557 = pnand %p554, %p556
  %p558 = pneg %p557
  %p559 = por %p553, %p558
  // Predicated region
  $region18: #{tpu_custom_call.1} parent=0 // pred_check
    %p560 = pneg %p559
  $region19: #{tpu_custom_call.1} parent=0 // pred_check_branch
    %562 = sbr.rel (%p560) target = $region21
  $region20: #{tpu_custom_call.1} parent=0 // pred_region
    %v563 = vlaneseq
    %v564 = vshrl.u32 %v563, 7
    %v565 = vadd.s32 %v564, 8
    %v566 = vadd.s32 %v564, 16
    %v567 = vadd.s32 %v564, 24
    %v568 = vadd.s32 %v564, 32
    %v569 = vadd.s32 %v564, 40
    %v570 = vadd.s32 %v564, 48
    %v571 = vadd.s32 %v564, 56
    %v572 = vadd.s32 %v564, 64
    %v573 = vadd.s32 %v564, 72
    %v574 = vadd.s32 %v564, 80
    %v575 = vadd.s32 %v564, 88
    %v576 = vadd.s32 %v564, 96
    %v577 = vadd.s32 %v564, 104
    %v578 = vadd.s32 %v564, 112
    %v579 = vadd.s32 %v564, 120
    %v580 = vstv %s392
    %v581 = vadd.s32 %v580, %v564
    %v582 = vadd.s32 %v580, %v565
    %v583 = vadd.s32 %v580, %v566
    %v584 = vadd.s32 %v580, %v567
    %v585 = vadd.s32 %v580, %v568
    %v586 = vadd.s32 %v580, %v569
    %v587 = vadd.s32 %v580, %v570
    %v588 = vadd.s32 %v580, %v571
    %v589 = vadd.s32 %v580, %v572
    %v590 = vadd.s32 %v580, %v573
    %v591 = vadd.s32 %v580, %v574
    %v592 = vadd.s32 %v580, %v575
    %v593 = vadd.s32 %v580, %v576
    %v594 = vadd.s32 %v580, %v577
    %v595 = vadd.s32 %v580, %v578
    %v596 = vadd.s32 %v580, %v579
    %v597 = vadd.s32 %v581, 4
    %v598 = vadd.s32 %v582, 4
    %v599 = vadd.s32 %v583, 4
    %v600 = vadd.s32 %v584, 4
    %v601 = vadd.s32 %v585, 4
    %v602 = vadd.s32 %v586, 4
    %v603 = vadd.s32 %v587, 4
    %v604 = vadd.s32 %v588, 4
    %v605 = vadd.s32 %v589, 4
    %v606 = vadd.s32 %v590, 4
    %v607 = vadd.s32 %v591, 4
    %v608 = vadd.s32 %v592, 4
    %v609 = vadd.s32 %v593, 4
    %v610 = vadd.s32 %v594, 4
    %v611 = vadd.s32 %v595, 4
    %v612 = vadd.s32 %v596, 4
    %vm613 = vcmp.lt.s32.totalorder %v597, 0
    %v614 = vsub.s32 0, %v597
    %v615 = vsel %vm613, %v614, %v597
    %v616 = vshrl.u32 %v615, 3
    %v617 = vand.u32 %v615, 7
    %v618 = vsub.s32 0, %v617
    %v619 = vsel %vm613, %v618, %v617
    %vm620 = vcmp.lt.s32.totalorder %v598, 0
    %v621 = vsub.s32 0, %v598
    %v622 = vsel %vm620, %v621, %v598
    %v623 = vshrl.u32 %v622, 3
    %v624 = vand.u32 %v622, 7
    %v625 = vsub.s32 0, %v624
    %v626 = vsel %vm620, %v625, %v624
    %vm627 = vcmp.lt.s32.totalorder %v599, 0
    %v628 = vsub.s32 0, %v599
    %v629 = vsel %vm627, %v628, %v599
    %v630 = vshrl.u32 %v629, 3
    %v631 = vand.u32 %v629, 7
    %v632 = vsub.s32 0, %v631
    %v633 = vsel %vm627, %v632, %v631
    %vm634 = vcmp.lt.s32.totalorder %v600, 0
    %v635 = vsub.s32 0, %v600
    %v636 = vsel %vm634, %v635, %v600
    %v637 = vshrl.u32 %v636, 3
    %v638 = vand.u32 %v636, 7
    %v639 = vsub.s32 0, %v638
    %v640 = vsel %vm634, %v639, %v638
    %vm641 = vcmp.lt.s32.totalorder %v601, 0
    %v642 = vsub.s32 0, %v601
    %v643 = vsel %vm641, %v642, %v601
    %v644 = vshrl.u32 %v643, 3
    %v645 = vand.u32 %v643, 7
    %v646 = vsub.s32 0, %v645
    %v647 = vsel %vm641, %v646, %v645
    %vm648 = vcmp.lt.s32.totalorder %v602, 0
    %v649 = vsub.s32 0, %v602
    %v650 = vsel %vm648, %v649, %v602
    %v651 = vshrl.u32 %v650, 3
    %v652 = vand.u32 %v650, 7
    %v653 = vsub.s32 0, %v652
    %v654 = vsel %vm648, %v653, %v652
    %vm655 = vcmp.lt.s32.totalorder %v603, 0
    %v656 = vsub.s32 0, %v603
    %v657 = vsel %vm655, %v656, %v603
    %v658 = vshrl.u32 %v657, 3
    %v659 = vand.u32 %v657, 7
    %v660 = vsub.s32 0, %v659
    %v661 = vsel %vm655, %v660, %v659
    %vm662 = vcmp.lt.s32.totalorder %v604, 0
    %v663 = vsub.s32 0, %v604
    %v664 = vsel %vm662, %v663, %v604
    %v665 = vshrl.u32 %v664, 3
    %v666 = vand.u32 %v664, 7
    %v667 = vsub.s32 0, %v666
    %v668 = vsel %vm662, %v667, %v666
    %vm669 = vcmp.lt.s32.totalorder %v605, 0
    %v670 = vsub.s32 0, %v605
    %v671 = vsel %vm669, %v670, %v605
    %v672 = vshrl.u32 %v671, 3
    %v673 = vand.u32 %v671, 7
    %v674 = vsub.s32 0, %v673
    %v675 = vsel %vm669, %v674, %v673
    %vm676 = vcmp.lt.s32.totalorder %v606, 0
    %v677 = vsub.s32 0, %v606
    %v678 = vsel %vm676, %v677, %v606
    %v679 = vshrl.u32 %v678, 3
    %v680 = vand.u32 %v678, 7
    %v681 = vsub.s32 0, %v680
    %v682 = vsel %vm676, %v681, %v680
    %vm683 = vcmp.lt.s32.totalorder %v607, 0
    %v684 = vsub.s32 0, %v607
    %v685 = vsel %vm683, %v684, %v607
    %v686 = vshrl.u32 %v685, 3
    %v687 = vand.u32 %v685, 7
    %v688 = vsub.s32 0, %v687
    %v689 = vsel %vm683, %v688, %v687
    %vm690 = vcmp.lt.s32.totalorder %v608, 0
    %v691 = vsub.s32 0, %v608
    %v692 = vsel %vm690, %v691, %v608
    %v693 = vshrl.u32 %v692, 3
    %v694 = vand.u32 %v692, 7
    %v695 = vsub.s32 0, %v694
    %v696 = vsel %vm690, %v695, %v694
    %vm697 = vcmp.lt.s32.totalorder %v609, 0
    %v698 = vsub.s32 0, %v609
    %v699 = vsel %vm697, %v698, %v609
    %v700 = vshrl.u32 %v699, 3
    %v701 = vand.u32 %v699, 7
    %v702 = vsub.s32 0, %v701
    %v703 = vsel %vm697, %v702, %v701
    %vm704 = vcmp.lt.s32.totalorder %v610, 0
    %v705 = vsub.s32 0, %v610
    %v706 = vsel %vm704, %v705, %v610
    %v707 = vshrl.u32 %v706, 3
    %v708 = vand.u32 %v706, 7
    %v709 = vsub.s32 0, %v708
    %v710 = vsel %vm704, %v709, %v708
    %vm711 = vcmp.lt.s32.totalorder %v611, 0
    %v712 = vsub.s32 0, %v611
    %v713 = vsel %vm711, %v712, %v611
    %v714 = vshrl.u32 %v713, 3
    %v715 = vand.u32 %v713, 7
    %v716 = vsub.s32 0, %v715
    %v717 = vsel %vm711, %v716, %v715
    %vm718 = vcmp.lt.s32.totalorder %v612, 0
    %v719 = vsub.s32 0, %v612
    %v720 = vsel %vm718, %v719, %v612
    %v721 = vshrl.u32 %v720, 3
    %v722 = vand.u32 %v720, 7
    %v723 = vsub.s32 0, %v722
    %v724 = vsel %vm718, %v723, %v722
    %vm725 = vcmp.ne.s32.totalorder %v619, 0
    %vm726 = vcmp.ne.s32.totalorder %v626, 0
    %vm727 = vcmp.ne.s32.totalorder %v633, 0
    %vm728 = vcmp.ne.s32.totalorder %v640, 0
    %vm729 = vcmp.ne.s32.totalorder %v647, 0
    %vm730 = vcmp.ne.s32.totalorder %v654, 0
    %vm731 = vcmp.ne.s32.totalorder %v661, 0
    %vm732 = vcmp.ne.s32.totalorder %v668, 0
    %vm733 = vcmp.ne.s32.totalorder %v675, 0
    %vm734 = vcmp.ne.s32.totalorder %v682, 0
    %vm735 = vcmp.ne.s32.totalorder %v689, 0
    %vm736 = vcmp.ne.s32.totalorder %v696, 0
    %vm737 = vcmp.ne.s32.totalorder %v703, 0
    %vm738 = vcmp.ne.s32.totalorder %v710, 0
    %vm739 = vcmp.ne.s32.totalorder %v717, 0
    %vm740 = vcmp.ne.s32.totalorder %v724, 0
    %vm741 = vcmp.lt.s32.totalorder %v619, 0
    %vm742 = vcmp.lt.s32.totalorder %v626, 0
    %vm743 = vcmp.lt.s32.totalorder %v633, 0
    %vm744 = vcmp.lt.s32.totalorder %v640, 0
    %vm745 = vcmp.lt.s32.totalorder %v647, 0
    %vm746 = vcmp.lt.s32.totalorder %v654, 0
    %vm747 = vcmp.lt.s32.totalorder %v661, 0
    %vm748 = vcmp.lt.s32.totalorder %v668, 0
    %vm749 = vcmp.lt.s32.totalorder %v675, 0
    %vm750 = vcmp.lt.s32.totalorder %v682, 0
    %vm751 = vcmp.lt.s32.totalorder %v689, 0
    %vm752 = vcmp.lt.s32.totalorder %v696, 0
    %vm753 = vcmp.lt.s32.totalorder %v703, 0
    %vm754 = vcmp.lt.s32.totalorder %v710, 0
    %vm755 = vcmp.lt.s32.totalorder %v717, 0
    %vm756 = vcmp.lt.s32.totalorder %v724, 0
    %vm757 = vmand %vm741, %vm725
    %vm758 = vmand %vm742, %vm726
    %vm759 = vmand %vm743, %vm727
    %vm760 = vmand %vm744, %vm728
    %vm761 = vmand %vm745, %vm729
    %vm762 = vmand %vm746, %vm730
    %vm763 = vmand %vm747, %vm731
    %vm764 = vmand %vm748, %vm732
    %vm765 = vmand %vm749, %vm733
    %vm766 = vmand %vm750, %vm734
    %vm767 = vmand %vm751, %vm735
    %vm768 = vmand %vm752, %vm736
    %vm769 = vmand %vm753, %vm737
    %vm770 = vmand %vm754, %vm738
    %vm771 = vmand %vm755, %vm739
    %vm772 = vmand %vm756, %vm740
    %v773 = vadd.s32 %v619, 8
    %v774 = vadd.s32 %v626, 8
    %v775 = vadd.s32 %v633, 8
    %v776 = vadd.s32 %v640, 8
    %v777 = vadd.s32 %v647, 8
    %v778 = vadd.s32 %v654, 8
    %v779 = vadd.s32 %v661, 8
    %v780 = vadd.s32 %v668, 8
    %v781 = vadd.s32 %v675, 8
    %v782 = vadd.s32 %v682, 8
    %v783 = vadd.s32 %v689, 8
    %v784 = vadd.s32 %v696, 8
    %v785 = vadd.s32 %v703, 8
    %v786 = vadd.s32 %v710, 8
    %v787 = vadd.s32 %v717, 8
    %v788 = vadd.s32 %v724, 8
    %v789 = vsel %vm757, %v773, %v619
    %v790 = vsel %vm758, %v774, %v626
    %v791 = vsel %vm759, %v775, %v633
    %v792 = vsel %vm760, %v776, %v640
    %v793 = vsel %vm761, %v777, %v647
    %v794 = vsel %vm762, %v778, %v654
    %v795 = vsel %vm763, %v779, %v661
    %v796 = vsel %vm764, %v780, %v668
    %v797 = vsel %vm765, %v781, %v675
    %v798 = vsel %vm766, %v782, %v682
    %v799 = vsel %vm767, %v783, %v689
    %v800 = vsel %vm768, %v784, %v696
    %v801 = vsel %vm769, %v785, %v703
    %v802 = vsel %vm770, %v786, %v710
    %v803 = vsel %vm771, %v787, %v717
    %v804 = vsel %vm772, %v788, %v724
    %v805 = vstv %s65
    %v806 = vsub.s32 %v789, %v805
    %v807 = vsub.s32 %v790, %v805
    %v808 = vsub.s32 %v791, %v805
    %v809 = vsub.s32 %v792, %v805
    %v810 = vsub.s32 %v793, %v805
    %v811 = vsub.s32 %v794, %v805
    %v812 = vsub.s32 %v795, %v805
    %v813 = vsub.s32 %v796, %v805
    %v814 = vsub.s32 %v797, %v805
    %v815 = vsub.s32 %v798, %v805
    %v816 = vsub.s32 %v799, %v805
    %v817 = vsub.s32 %v800, %v805
    %v818 = vsub.s32 %v801, %v805
    %v819 = vsub.s32 %v802, %v805
    %v820 = vsub.s32 %v803, %v805
    %v821 = vsub.s32 %v804, %v805
    %v822 = vlaneseq
    %v823 = vand.u32 %v822, 127
    %vm824 = vcmp.eq.s32.totalorder %v823, %v806
    %vm825 = vcmp.eq.s32.totalorder %v823, %v807
    %vm826 = vcmp.eq.s32.totalorder %v823, %v808
    %vm827 = vcmp.eq.s32.totalorder %v823, %v809
    %vm828 = vcmp.eq.s32.totalorder %v823, %v810
    %vm829 = vcmp.eq.s32.totalorder %v823, %v811
    %vm830 = vcmp.eq.s32.totalorder %v823, %v812
    %vm831 = vcmp.eq.s32.totalorder %v823, %v813
    %vm832 = vcmp.eq.s32.totalorder %v823, %v814
    %vm833 = vcmp.eq.s32.totalorder %v823, %v815
    %vm834 = vcmp.eq.s32.totalorder %v823, %v816
    %vm835 = vcmp.eq.s32.totalorder %v823, %v817
    %vm836 = vcmp.eq.s32.totalorder %v823, %v818
    %vm837 = vcmp.eq.s32.totalorder %v823, %v819
    %vm838 = vcmp.eq.s32.totalorder %v823, %v820
    %vm839 = vcmp.eq.s32.totalorder %v823, %v821
    %v840 = vld [vmem:[#allocation3] sm:$0xff]
    %v841 = vld [vmem:[#allocation3 + $0x8] sm:$0xff]
    %v842 = vld [vmem:[#allocation3 + $0x10] sm:$0xff]
    %v843 = vld [vmem:[#allocation3 + $0x18] sm:$0xff]
    %v844 = vld [vmem:[#allocation3 + $0x20] sm:$0xff]
    %v845 = vld [vmem:[#allocation3 + $0x28] sm:$0xff]
    %v846 = vld [vmem:[#allocation3 + $0x30] sm:$0xff]
    %v847 = vld [vmem:[#allocation3 + $0x38] sm:$0xff]
    %v848 = vld [vmem:[#allocation3 + $0x40] sm:$0xff]
    %v849 = vld [vmem:[#allocation3 + $0x48] sm:$0xff]
    %v850 = vld [vmem:[#allocation3 + $0x50] sm:$0xff]
    %v851 = vld [vmem:[#allocation3 + $0x58] sm:$0xff]
    %v852 = vld [vmem:[#allocation3 + $0x60] sm:$0xff]
    %v853 = vld [vmem:[#allocation3 + $0x68] sm:$0xff]
    %v854 = vld [vmem:[#allocation3 + $0x70] sm:$0xff]
    %v855 = vld [vmem:[#allocation3 + $0x78] sm:$0xff]
    %v856 = vsel %vm824, %v313, 0.0
    %v857 = vsel %vm825, %v315, 0.0
    %v858 = vsel %vm826, %v317, 0.0
    %v859 = vsel %vm827, %v319, 0.0
    %v860 = vsel %vm828, %v321, 0.0
    %v861 = vsel %vm829, %v323, 0.0
    %v862 = vsel %vm830, %v325, 0.0
    %v863 = vsel %vm831, %v327, 0.0
    %v864 = vsel %vm832, %v329, 0.0
    %v865 = vsel %vm833, %v331, 0.0
    %v866 = vsel %vm834, %v333, 0.0
    %v867 = vsel %vm835, %v335, 0.0
    %v868 = vsel %vm836, %v337, 0.0
    %v869 = vsel %vm837, %v339, 0.0
    %v870 = vsel %vm838, %v341, 0.0
    %v871 = vsel %vm839, %v343, 0.0
    %872 = vadd.xlane.f32.xlu0 %v856
    %v873 = vpop.xlane.xlu0 %872
    %874 = vadd.xlane.f32.xlu0 %v857
    %v875 = vpop.xlane.xlu0 %874
    %876 = vadd.xlane.f32.xlu0 %v858
    %v877 = vpop.xlane.xlu0 %876
    %878 = vadd.xlane.f32.xlu0 %v859
    %v879 = vpop.xlane.xlu0 %878
    %880 = vadd.xlane.f32.xlu0 %v860
    %v881 = vpop.xlane.xlu0 %880
    %882 = vadd.xlane.f32.xlu0 %v861
    %v883 = vpop.xlane.xlu0 %882
    %884 = vadd.xlane.f32.xlu0 %v862
    %v885 = vpop.xlane.xlu0 %884
    %886 = vadd.xlane.f32.xlu0 %v863
    %v887 = vpop.xlane.xlu0 %886
    %888 = vadd.xlane.f32.xlu0 %v864
    %v889 = vpop.xlane.xlu0 %888
    %890 = vadd.xlane.f32.xlu0 %v865
    %v891 = vpop.xlane.xlu0 %890
    %892 = vadd.xlane.f32.xlu0 %v866
    %v893 = vpop.xlane.xlu0 %892
    %894 = vadd.xlane.f32.xlu0 %v867
    %v895 = vpop.xlane.xlu0 %894
    %896 = vadd.xlane.f32.xlu0 %v868
    %v897 = vpop.xlane.xlu0 %896
    %898 = vadd.xlane.f32.xlu0 %v869
    %v899 = vpop.xlane.xlu0 %898
    %900 = vadd.xlane.f32.xlu0 %v870
    %v901 = vpop.xlane.xlu0 %900
    %902 = vadd.xlane.f32.xlu0 %v871
    %v903 = vpop.xlane.xlu0 %902
    %v904 = vadd.f32 %v840, %v873
    %v905 = vadd.f32 %v841, %v875
    %v906 = vadd.f32 %v842, %v877
    %v907 = vadd.f32 %v843, %v879
    %v908 = vadd.f32 %v844, %v881
    %v909 = vadd.f32 %v845, %v883
    %v910 = vadd.f32 %v846, %v885
    %v911 = vadd.f32 %v847, %v887
    %v912 = vadd.f32 %v848, %v889
    %v913 = vadd.f32 %v849, %v891
    %v914 = vadd.f32 %v850, %v893
    %v915 = vadd.f32 %v851, %v895
    %v916 = vadd.f32 %v852, %v897
    %v917 = vadd.f32 %v853, %v899
    %v918 = vadd.f32 %v854, %v901
    %v919 = vadd.f32 %v855, %v903
    %vm920 = vcmask 7168
    %921 = vst.msk [vmem:[#allocation3] sm:$0xff] %vm920, %v904
    %922 = vst.msk [vmem:[#allocation3 + $0x8] sm:$0xff] %vm920, %v905
    %923 = vst.msk [vmem:[#allocation3 + $0x10] sm:$0xff] %vm920, %v906
    %924 = vst.msk [vmem:[#allocation3 + $0x18] sm:$0xff] %vm920, %v907
    %925 = vst.msk [vmem:[#allocation3 + $0x20] sm:$0xff] %vm920, %v908
    %926 = vst.msk [vmem:[#allocation3 + $0x28] sm:$0xff] %vm920, %v909
    %927 = vst.msk [vmem:[#allocation3 + $0x30] sm:$0xff] %vm920, %v910
    %928 = vst.msk [vmem:[#allocation3 + $0x38] sm:$0xff] %vm920, %v911
    %929 = vst.msk [vmem:[#allocation3 + $0x40] sm:$0xff] %vm920, %v912
    %930 = vst.msk [vmem:[#allocation3 + $0x48] sm:$0xff] %vm920, %v913
    %931 = vst.msk [vmem:[#allocation3 + $0x50] sm:$0xff] %vm920, %v914
    %932 = vst.msk [vmem:[#allocation3 + $0x58] sm:$0xff] %vm920, %v915
    %933 = vst.msk [vmem:[#allocation3 + $0x60] sm:$0xff] %vm920, %v916
    %934 = vst.msk [vmem:[#allocation3 + $0x68] sm:$0xff] %vm920, %v917
    %935 = vst.msk [vmem:[#allocation3 + $0x70] sm:$0xff] %vm920, %v918
    %936 = vst.msk [vmem:[#allocation3 + $0x78] sm:$0xff] %vm920, %v919
  $region21: #{tpu_custom_call.1} parent=0 // pred_fallthru
    _
  // Predicated region
  $region22: #{tpu_custom_call.1} parent=0 // pred_check
    %p937 = pneg %p12
  $region23: #{tpu_custom_call.1} parent=0 // pred_check_branch
    %939 = sbr.rel (%p937) target = $region25
  $region24: #{tpu_custom_call.1} parent=0 // pred_region
    %v940 = vld [vmem:[#allocation2] sm:$0xff]
    %v941 = vld [vmem:[#allocation2 + $0x8] sm:$0xff]
    %v942 = vld [vmem:[#allocation2 + $0x10] sm:$0xff]
    %v943 = vld [vmem:[#allocation2 + $0x18] sm:$0xff]
    %v944 = vld [vmem:[#allocation2 + $0x20] sm:$0xff]
    %v945 = vld [vmem:[#allocation2 + $0x28] sm:$0xff]
    %v946 = vld [vmem:[#allocation2 + $0x30] sm:$0xff]
    %v947 = vld [vmem:[#allocation2 + $0x38] sm:$0xff]
    %v948 = vld [vmem:[#allocation2 + $0x40] sm:$0xff]
    %v949 = vld [vmem:[#allocation2 + $0x48] sm:$0xff]
    %v950 = vld [vmem:[#allocation2 + $0x50] sm:$0xff]
    %v951 = vld [vmem:[#allocation2 + $0x58] sm:$0xff]
    %v952 = vld [vmem:[#allocation2 + $0x60] sm:$0xff]
    %v953 = vld [vmem:[#allocation2 + $0x68] sm:$0xff]
    %v954 = vld [vmem:[#allocation2 + $0x70] sm:$0xff]
    %v955 = vld [vmem:[#allocation2 + $0x78] sm:$0xff]
    %956 = vadd.xlane.f32.xlu0 %v940
    %v957 = vpop.xlane.xlu0 %956
    %958 = vadd.xlane.f32.xlu0 %v941
    %v959 = vpop.xlane.xlu0 %958
    %960 = vadd.xlane.f32.xlu0 %v942
    %v961 = vpop.xlane.xlu0 %960
    %962 = vadd.xlane.f32.xlu0 %v943
    %v963 = vpop.xlane.xlu0 %962
    %964 = vadd.xlane.f32.xlu0 %v944
    %v965 = vpop.xlane.xlu0 %964
    %966 = vadd.xlane.f32.xlu0 %v945
    %v967 = vpop.xlane.xlu0 %966
    %968 = vadd.xlane.f32.xlu0 %v946
    %v969 = vpop.xlane.xlu0 %968
    %970 = vadd.xlane.f32.xlu0 %v947
    %v971 = vpop.xlane.xlu0 %970
    %972 = vadd.xlane.f32.xlu0 %v948
    %v973 = vpop.xlane.xlu0 %972
    %974 = vadd.xlane.f32.xlu0 %v949
    %v975 = vpop.xlane.xlu0 %974
    %976 = vadd.xlane.f32.xlu0 %v950
    %v977 = vpop.xlane.xlu0 %976
    %978 = vadd.xlane.f32.xlu0 %v951
    %v979 = vpop.xlane.xlu0 %978
    %980 = vadd.xlane.f32.xlu0 %v952
    %v981 = vpop.xlane.xlu0 %980
    %982 = vadd.xlane.f32.xlu0 %v953
    %v983 = vpop.xlane.xlu0 %982
    %984 = vadd.xlane.f32.xlu0 %v954
    %v985 = vpop.xlane.xlu0 %984
    %986 = vadd.xlane.f32.xlu0 %v955
    %v987 = vpop.xlane.xlu0 %986
    %v988 = vsub.f32 %v957, 120.0
    %v989 = vsub.f32 %v959, 120.0
    %v990 = vsub.f32 %v961, 120.0
    %v991 = vsub.f32 %v963, 120.0
    %v992 = vsub.f32 %v965, 120.0
    %v993 = vsub.f32 %v967, 120.0
    %v994 = vsub.f32 %v969, 120.0
    %v995 = vsub.f32 %v971, 120.0
    %v996 = vsub.f32 %v973, 120.0
    %v997 = vsub.f32 %v975, 120.0
    %v998 = vsub.f32 %v977, 120.0
    %v999 = vsub.f32 %v979, 120.0
    %v1000 = vsub.f32 %v981, 120.0
    %v1001 = vsub.f32 %v983, 120.0
    %v1002 = vsub.f32 %v985, 120.0
    %v1003 = vsub.f32 %v987, 120.0
    %v1004 = vlog2.pop %v988
    %v1005 = vmul.f32 %v1004, 0.6931472
    %v1006 = vlog2.pop %v989
    %v1007 = vmul.f32 %v1006, 0.6931472
    %v1008 = vlog2.pop %v990
    %v1009 = vmul.f32 %v1008, 0.6931472
    %v1010 = vlog2.pop %v991
    %v1011 = vmul.f32 %v1010, 0.6931472
    %v1012 = vlog2.pop %v992
    %v1013 = vmul.f32 %v1012, 0.6931472
    %v1014 = vlog2.pop %v993
    %v1015 = vmul.f32 %v1014, 0.6931472
    %v1016 = vlog2.pop %v994
    %v1017 = vmul.f32 %v1016, 0.6931472
    %v1018 = vlog2.pop %v995
    %v1019 = vmul.f32 %v1018, 0.6931472
    %v1020 = vlog2.pop %v996
    %v1021 = vmul.f32 %v1020, 0.6931472
    %v1022 = vlog2.pop %v997
    %v1023 = vmul.f32 %v1022, 0.6931472
    %v1024 = vlog2.pop %v998
    %v1025 = vmul.f32 %v1024, 0.6931472
    %v1026 = vlog2.pop %v999
    %v1027 = vmul.f32 %v1026, 0.6931472
    %v1028 = vlog2.pop %v1000
    %v1029 = vmul.f32 %v1028, 0.6931472
    %v1030 = vlog2.pop %v1001
    %v1031 = vmul.f32 %v1030, 0.6931472
    %v1032 = vlog2.pop %v1002
    %v1033 = vmul.f32 %v1032, 0.6931472
    %v1034 = vlog2.pop %v1003
    %v1035 = vmul.f32 %v1034, 0.6931472
    %v1036 = vld [vmem:[#allocation3] sm:$0xff]
    %v1037 = vld [vmem:[#allocation3 + $0x8] sm:$0xff]
    %v1038 = vld [vmem:[#allocation3 + $0x10] sm:$0xff]
    %v1039 = vld [vmem:[#allocation3 + $0x18] sm:$0xff]
    %v1040 = vld [vmem:[#allocation3 + $0x20] sm:$0xff]
    %v1041 = vld [vmem:[#allocation3 + $0x28] sm:$0xff]
    %v1042 = vld [vmem:[#allocation3 + $0x30] sm:$0xff]
    %v1043 = vld [vmem:[#allocation3 + $0x38] sm:$0xff]
    %v1044 = vld [vmem:[#allocation3 + $0x40] sm:$0xff]
    %v1045 = vld [vmem:[#allocation3 + $0x48] sm:$0xff]
    %v1046 = vld [vmem:[#allocation3 + $0x50] sm:$0xff]
    %v1047 = vld [vmem:[#allocation3 + $0x58] sm:$0xff]
    %v1048 = vld [vmem:[#allocation3 + $0x60] sm:$0xff]
    %v1049 = vld [vmem:[#allocation3 + $0x68] sm:$0xff]
    %v1050 = vld [vmem:[#allocation3 + $0x70] sm:$0xff]
    %v1051 = vld [vmem:[#allocation3 + $0x78] sm:$0xff]
    %v1052 = vlog2.pop %v1036
    %v1053 = vmul.f32 %v1052, 0.6931472
    %v1054 = vlog2.pop %v1037
    %v1055 = vmul.f32 %v1054, 0.6931472
    %v1056 = vlog2.pop %v1038
    %v1057 = vmul.f32 %v1056, 0.6931472
    %v1058 = vlog2.pop %v1039
    %v1059 = vmul.f32 %v1058, 0.6931472
    %v1060 = vlog2.pop %v1040
    %v1061 = vmul.f32 %v1060, 0.6931472
    %v1062 = vlog2.pop %v1041
    %v1063 = vmul.f32 %v1062, 0.6931472
    %v1064 = vlog2.pop %v1042
    %v1065 = vmul.f32 %v1064, 0.6931472
    %v1066 = vlog2.pop %v1043
    %v1067 = vmul.f32 %v1066, 0.6931472
    %v1068 = vlog2.pop %v1044
    %v1069 = vmul.f32 %v1068, 0.6931472
    %v1070 = vlog2.pop %v1045
    %v1071 = vmul.f32 %v1070, 0.6931472
    %v1072 = vlog2.pop %v1046
    %v1073 = vmul.f32 %v1072, 0.6931472
    %v1074 = vlog2.pop %v1047
    %v1075 = vmul.f32 %v1074, 0.6931472
    %v1076 = vlog2.pop %v1048
    %v1077 = vmul.f32 %v1076, 0.6931472
    %v1078 = vlog2.pop %v1049
    %v1079 = vmul.f32 %v1078, 0.6931472
    %v1080 = vlog2.pop %v1050
    %v1081 = vmul.f32 %v1080, 0.6931472
    %v1082 = vlog2.pop %v1051
    %v1083 = vmul.f32 %v1082, 0.6931472
    %v1084 = vsub.f32 %v1005, %v1053
    %v1085 = vsub.f32 %v1007, %v1055
    %v1086 = vsub.f32 %v1009, %v1057
    %v1087 = vsub.f32 %v1011, %v1059
    %v1088 = vsub.f32 %v1013, %v1061
    %v1089 = vsub.f32 %v1015, %v1063
    %v1090 = vsub.f32 %v1017, %v1065
    %v1091 = vsub.f32 %v1019, %v1067
    %v1092 = vsub.f32 %v1021, %v1069
    %v1093 = vsub.f32 %v1023, %v1071
    %v1094 = vsub.f32 %v1025, %v1073
    %v1095 = vsub.f32 %v1027, %v1075
    %v1096 = vsub.f32 %v1029, %v1077
    %v1097 = vsub.f32 %v1031, %v1079
    %v1098 = vsub.f32 %v1033, %v1081
    %v1099 = vsub.f32 %v1035, %v1083
    %vm1100 = vcmask 7168
    %1101 = vst.msk [vmem:[%s2] sm:$0xff] %vm1100, %v1084
    %1102 = vst.msk [vmem:[%s2 + $0x8] sm:$0xff] %vm1100, %v1085
    %1103 = vst.msk [vmem:[%s2 + $0x10] sm:$0xff] %vm1100, %v1086
    %1104 = vst.msk [vmem:[%s2 + $0x18] sm:$0xff] %vm1100, %v1087
    %1105 = vst.msk [vmem:[%s2 + $0x20] sm:$0xff] %vm1100, %v1088
    %1106 = vst.msk [vmem:[%s2 + $0x28] sm:$0xff] %vm1100, %v1089
    %1107 = vst.msk [vmem:[%s2 + $0x30] sm:$0xff] %vm1100, %v1090
    %1108 = vst.msk [vmem:[%s2 + $0x38] sm:$0xff] %vm1100, %v1091
    %1109 = vst.msk [vmem:[%s2 + $0x40] sm:$0xff] %vm1100, %v1092
    %1110 = vst.msk [vmem:[%s2 + $0x48] sm:$0xff] %vm1100, %v1093
    %1111 = vst.msk [vmem:[%s2 + $0x50] sm:$0xff] %vm1100, %v1094
    %1112 = vst.msk [vmem:[%s2 + $0x58] sm:$0xff] %vm1100, %v1095
    %1113 = vst.msk [vmem:[%s2 + $0x60] sm:$0xff] %vm1100, %v1096
    %1114 = vst.msk [vmem:[%s2 + $0x68] sm:$0xff] %vm1100, %v1097
    %1115 = vst.msk [vmem:[%s2 + $0x70] sm:$0xff] %vm1100, %v1098
    %1116 = vst.msk [vmem:[%s2 + $0x78] sm:$0xff] %vm1100, %v1099
  $region25: #{tpu_custom_call.1} parent=0 // pred_fallthru
    _
  // Predicated region
  $region26: #{tpu_custom_call.1} parent=0 // pred_check
    _
  $region27: #{tpu_custom_call.1} parent=0 // pred_check_branch
    %1118 = sbr.rel (0) target = $region29
  $region28: #{tpu_custom_call.1} parent=0 // pred_region
    _
  $region29: #{tpu_custom_call.1} parent=0 // pred_fallthru
    _
  // Predicated region
  $region30: #{tpu_custom_call.1} parent=0 // pred_check
    _
  $region31: #{tpu_custom_call.1} parent=0 // pred_check_branch
    %1120 = sbr.rel (0) target = $region33
  $region32: #{tpu_custom_call.1} parent=0 // pred_region
    _
  $region33: #{tpu_custom_call.1} parent=0 // pred_fallthru
    _

</llo_original>
